<compile_context>
chip_gen: v6e
topology: v6e:2x2x1
jax: 0.10.0
libtpu: 0.0.40
codegen_flags: <defaults>
</compile_context>

<pallas_src>
import jax
import jax.numpy as jnp
from jax.experimental import pallas as pl
from jax.experimental.pallas import tpu as pltpu


def _round_up(x: int, m: int) -> int:
    return ((x + m - 1) // m) * m


def _round_down(x: int, m: int) -> int:
    return (x // m) * m


def _make_gap_head_kernel(hw: int, thw: int, lanes: int, mask_ragged: bool):
    """Builds the kernel closure for given static spatial sizes.

    Refs:
      x_ref:   [TB, C, THW]   activations (native channels-first layout)
      w_ref:   [C, Kp]        classifier weight (1/(H*W) pre-folded)
      b_ref:   [1, Kp]        bias
      out_ref: [TB, Kp]       logits
      acc_ref: [TB, C, lanes] f32 spatial partial-sum accumulator (scratch)
    """
    n_chunks = thw // lanes
    assert n_chunks >= 1 and thw == n_chunks * lanes

    def kernel(x_ref, w_ref, b_ref, out_ref, acc_ref):
        j = pl.program_id(1)

        @pl.when(j == 0)
        def _init():
            acc_ref[...] = jnp.zeros_like(acc_ref)

        x = x_ref[...].astype(jnp.float32)            # [TB, C, THW]
        if mask_ragged:
            # Zero out the out-of-range columns of the last (ragged) tile.
            lane_idx = jax.lax.broadcasted_iota(jnp.int32, x.shape, 2)
            x = jnp.where(j * thw + lane_idx < hw, x, 0.0)

        # Tile-aligned 128-wide slices added together: pure VPU vreg adds,
        # no cross-lane work and no relayout.
        part = x[:, :, 0:lanes]
        for t in range(1, n_chunks):
            part = part + x[:, :, t * lanes:(t + 1) * lanes]
        acc_ref[...] += part

        @pl.when(j == pl.num_programs(1) - 1)
        def _finalize():
            # Single lane-axis reduce (XLU) once per batch tile, then MXU.
            pooled = jnp.sum(acc_ref[...], axis=2)    # [TB, C]
            logits = jnp.dot(pooled, w_ref[...],
                             preferred_element_type=jnp.float32)
            out_ref[...] = (logits + b_ref[...]).astype(out_ref.dtype)

    return kernel


def vision_forward(images, weight, bias, *, spatial_tile=None,
                   target_block_bytes=2 << 20):
    """images: list of [C, H, W] arrays (PyTorch per-image convention).
    weight: [C, num_classes], bias: [num_classes].
    Returns {"logits": [B, num_classes]} (BaseVisionModel.forward contract).
    """
    x = jnp.stack(images, axis=0)                     # [B, C, H, W]
    b, c, h, w = x.shape
    hw = h * w
    x = x.reshape(b, c, hw)                           # metadata-only reshape
    k = weight.shape[1]
    k_pad = _round_up(k, 128)
    dsize = x.dtype.itemsize

    # ---- batch tile: >=2 tiles when possible (v7x dual TensorCore) ---------
    if b <= 8:
        tb = b                                        # single tile (full dim)
    elif b <= 256:
        tb = _round_up(pl.cdiv(b, 2), 8)              # >= 2 parallel tiles
    else:
        tb = 128

    # ---- spatial tile: lane-dense, ~1-2 MiB blocks, bounded unroll ---------
    if hw < 128:
        thw = hw
        lanes = hw
    else:
        lanes = 128
        max_thw = _round_down(hw, 128)
        if spatial_tile is not None:
            thw = min(max(_round_down(spatial_tile, 128), 128), max_thw)
        else:
            tgt_elems = max(1, target_block_bytes // (tb * c * dsize))
            thw = min(max(_round_down(tgt_elems, 128), 128), max_thw, 32 * 128)
    mask_ragged = (hw % thw) != 0

    grid = (pl.cdiv(b, tb), pl.cdiv(hw, thw))

    # Fold the 1/(H*W) global-average-pool scale into the (tiny) weight;
    # pad classes to the lane width only.  (Store as bf16 for very large
    # heads; negligible here.)
    w_p = jnp.pad(weight.astype(jnp.float32) / float(hw),
                  ((0, 0), (0, k_pad - k)))
    bias_p = jnp.pad(bias.astype(jnp.float32).reshape(1, -1),
                     ((0, 0), (0, k_pad - k)))

    # ---- generation-aware VMEM budget --------------------------------------
    try:
        vmem_cap = pltpu.get_tpu_info().vmem_capacity_bytes
    except Exception:  # pragma: no cover - conservative fallback
        vmem_cap = 64 * 1024 * 1024
    act_block = tb * c * thw * dsize
    need = (2 * act_block                 # double-buffered activations
            + 2 * c * k_pad * 4           # resident weight buffers
            + 2 * k_pad * 4               # bias buffers
            + 2 * tb * k_pad * 4          # output buffers
            + tb * c * lanes * 4)         # accumulator scratch
    vmem_limit = int(min(vmem_cap * 3 // 4,
                         max(2 * need + (16 << 20), 32 << 20)))

    kernel = _make_gap_head_kernel(hw, thw, lanes, mask_ragged)

    logits_p = pl.pallas_call(
        kernel,
        out_shape=jax.ShapeDtypeStruct((b, k_pad), jnp.float32),
        grid_spec=pltpu.PrefetchScalarGridSpec(
            num_scalar_prefetch=0,
            grid=grid,
            in_specs=[
                # Activations: streamed (double-buffered) over (batch, spatial),
                # native [B, C, HW] layout -> HW on the 128-lane axis.
                pl.BlockSpec((tb, c, thw), lambda i, j: (i, 0, j)),
                # Classifier weight & bias: constant index -> resident block.
                pl.BlockSpec((c, k_pad), lambda i, j: (0, 0)),
                pl.BlockSpec((1, k_pad), lambda i, j: (0, 0)),
            ],
            out_specs=pl.BlockSpec((tb, k_pad), lambda i, j: (i, 0)),
            scratch_shapes=[pltpu.VMEM((tb, c, lanes), jnp.float32)],
        ),
        compiler_params=pltpu.CompilerParams(
            dimension_semantics=("parallel", "arbitrary"),
            vmem_limit_bytes=vmem_limit,
        ),
    )(x, w_p, bias_p)

    return {"logits": logits_p[:, :k]}


def _reference(imgs, weight, bias):
    b, c, h, w = imgs.shape
    return jnp.mean(imgs.reshape(b, c, h * w), axis=-1) @ weight + bias


if __name__ == "__main__":
    key = jax.random.PRNGKey(0)
    k_img, k_w, k_b, k_img2 = jax.random.split(key, 4)

    # Config 1: batch=2, channels=4, spatial=16x16, num_classes=8.
    # spatial_tile=128 -> 2 spatial grid steps (init/accumulate/finalize path).
    B, C, H, W = 2, 4, 16, 16
    NUM_CLASSES = 8
    imgs = jax.random.normal(k_img, (B, C, H, W), dtype=jnp.float32)
    weight = jax.random.normal(k_w, (C, NUM_CLASSES), dtype=jnp.float32) * 0.1
    bias = jax.random.normal(k_b, (NUM_CLASSES,), dtype=jnp.float32) * 0.01

    out = vision_forward([imgs[i] for i in range(B)], weight, bias,
                         spatial_tile=128)
    logits = jax.block_until_ready(out["logits"])
    ref = _reference(imgs, weight, bias)
    assert logits.shape == (B, NUM_CLASSES)
    assert jnp.allclose(logits, ref, atol=1e-5, rtol=1e-5), "mismatch (cfg 1)"

    # Config 2: ragged spatial extent (16x10 -> HW=160, tile 128) exercises
    # the in-kernel iota mask for the last spatial tile.
    H2, W2 = 16, 10
    imgs2 = jax.random.normal(k_img2, (B, C, H2, W2), dtype=jnp.float32)
    out2 = vision_forward([imgs2[i] for i in range(B)], weight, bias)
    logits2 = jax.block_until_ready(out2["logits"])
    ref2 = _reference(imgs2, weight, bias)
    assert jnp.allclose(logits2, ref2, atol=1e-5, rtol=1e-5), "mismatch (cfg 2)"

    print("KERNEL_OK")
</pallas_src>

<mosaic_0001>
module attributes {stable_mosaic.version = 11 : i64} {
  func.func @kernel(%arg0: i32, %arg1: i32, %arg2: memref<2x4x128xf32, #tpu.memory_space<vmem>>, %arg3: memref<4x128xf32, #tpu.memory_space<vmem>>, %arg4: memref<1x128xf32, #tpu.memory_space<vmem>>, %arg5: memref<2x128xf32, #tpu.memory_space<vmem>>, %arg6: memref<2x4x128xf32, #tpu.memory_space<vmem>>) attributes {dimension_semantics = [#tpu.dimension_semantics<parallel>, #tpu.dimension_semantics<arbitrary>], iteration_bounds = array<i64: 1, 2>, scalar_prefetch = 0 : i64, scratch_operands = 1 : i64, tpu.core_type = #tpu.core_type<tc>, window_params = [{transform_indices = @transform_0, window_bounds = array<i64: 2, 4, 128>}, {pipeline_mode = #tpu.pipeline_mode<synchronous>, transform_indices = @transform_1, window_bounds = array<i64: 4, 128>}, {pipeline_mode = #tpu.pipeline_mode<synchronous>, transform_indices = @transform_2, window_bounds = array<i64: 1, 128>}, {transform_indices = @transform_3, window_bounds = array<i64: 2, 128>}]} {
    %c0_i32 = arith.constant 0 : i32
    %0 = arith.cmpi eq, %arg1, %c0_i32 : i32
    %1 = arith.extui %0 : i1 to i32
    %c0_i32_0 = arith.constant 0 : i32
    %2 = arith.cmpi ne, %1, %c0_i32_0 : i32
    scf.if %2 {
      %cst = arith.constant 0.000000e+00 : f32
      %10 = vector.broadcast %cst : f32 to vector<2x4x128xf32>
      %c0_10 = arith.constant 0 : index
      %c0_11 = arith.constant 0 : index
      %c0_12 = arith.constant 0 : index
      %11 = vector.load %arg6[%c0_10, %c0_11, %c0_12] : memref<2x4x128xf32, #tpu.memory_space<vmem>>, vector<2x4x128xf32>
      tpu.vector_store %arg6[%c0_10, %c0_11, %c0_12], %10 {strides = array<i32>} : memref<2x4x128xf32, #tpu.memory_space<vmem>>, vector<2x4x128xf32>,
    } else {
    }
    %c0 = arith.constant 0 : index
    %c0_1 = arith.constant 0 : index
    %c0_2 = arith.constant 0 : index
    %3 = vector.load %arg2[%c0, %c0_1, %c0_2] : memref<2x4x128xf32, #tpu.memory_space<vmem>>, vector<2x4x128xf32>
    %c0_3 = arith.constant 0 : index
    %c0_4 = arith.constant 0 : index
    %c0_5 = arith.constant 0 : index
    %4 = vector.load %arg6[%c0_3, %c0_4, %c0_5] : memref<2x4x128xf32, #tpu.memory_space<vmem>>, vector<2x4x128xf32>
    %5 = arith.addf %4, %3 : vector<2x4x128xf32>
    %c0_6 = arith.constant 0 : index
    %c0_7 = arith.constant 0 : index
    %c0_8 = arith.constant 0 : index
    %6 = vector.load %arg6[%c0_6, %c0_7, %c0_8] : memref<2x4x128xf32, #tpu.memory_space<vmem>>, vector<2x4x128xf32>
    tpu.vector_store %arg6[%c0_6, %c0_7, %c0_8], %5 {strides = array<i32>} : memref<2x4x128xf32, #tpu.memory_space<vmem>>, vector<2x4x128xf32>,
    %c1_i32 = arith.constant 1 : i32
    %7 = arith.cmpi eq, %arg1, %c1_i32 : i32
    %8 = arith.extui %7 : i1 to i32
    %c0_i32_9 = arith.constant 0 : i32
    %9 = arith.cmpi ne, %8, %c0_i32_9 : i32
    scf.if %9 {
      %c0_10 = arith.constant 0 : index
      %c0_11 = arith.constant 0 : index
      %c0_12 = arith.constant 0 : index
      %10 = vector.load %arg6[%c0_10, %c0_11, %c0_12] : memref<2x4x128xf32, #tpu.memory_space<vmem>>, vector<2x4x128xf32>
      %cst = arith.constant dense<0.000000e+00> : vector<2x4xf32>
      %11 = vector.multi_reduction <add>, %10, %cst [2] : vector<2x4x128xf32> to vector<2x4xf32>
      %c0_13 = arith.constant 0 : index
      %c0_14 = arith.constant 0 : index
      %12 = vector.load %arg3[%c0_13, %c0_14] : memref<4x128xf32, #tpu.memory_space<vmem>>, vector<4x128xf32>
      %cst_15 = arith.constant dense<0.000000e+00> : vector<2x128xf32>
      %13 = tpu.matmul %11, %12, %cst_15 {dimension_numbers = #tpu.dot_dimension_numbers<[1], [0], [0], [1], [0, 0, 1, 1], [], []>} : vector<2x4xf32>, vector<4x128xf32>, vector<2x128xf32> -> vector<2x128xf32>
      %c0_16 = arith.constant 0 : index
      %c0_17 = arith.constant 0 : index
      %14 = vector.load %arg4[%c0_16, %c0_17] : memref<1x128xf32, #tpu.memory_space<vmem>>, vector<1x128xf32>
      %15 = vector.broadcast %14 : vector<1x128xf32> to vector<2x128xf32>
      %16 = arith.addf %13, %15 : vector<2x128xf32>
      %c0_18 = arith.constant 0 : index
      %c0_19 = arith.constant 0 : index
      %17 = vector.load %arg5[%c0_18, %c0_19] : memref<2x128xf32, #tpu.memory_space<vmem>>, vector<2x128xf32>
      tpu.vector_store %arg5[%c0_18, %c0_19], %16 {strides = array<i32>} : memref<2x128xf32, #tpu.memory_space<vmem>>, vector<2x128xf32>,
    } else {
    }
    return
  }
  func.func @transform_0(%arg0: i32, %arg1: i32) -> (i32, i32, i32) {
    %c0_i32 = arith.constant 0 : i32
    %c0_i32_0 = arith.constant 0 : i32
    return %arg0, %c0_i32, %arg1 : i32, i32, i32
  }
  func.func @transform_1(%arg0: i32, %arg1: i32) -> (i32, i32) {
    %c0_i32 = arith.constant 0 : i32
    %c0_i32_0 = arith.constant 0 : i32
    %c0_i32_1 = arith.constant 0 : i32
    return %c0_i32, %c0_i32_0 : i32, i32
  }
  func.func @transform_2(%arg0: i32, %arg1: i32) -> (i32, i32) {
    %c0_i32 = arith.constant 0 : i32
    %c0_i32_0 = arith.constant 0 : i32
    %c0_i32_1 = arith.constant 0 : i32
    return %c0_i32, %c0_i32_0 : i32, i32
  }
  func.func @transform_3(%arg0: i32, %arg1: i32) -> (i32, i32) {
    %c0_i32 = arith.constant 0 : i32
    %c0_i32_0 = arith.constant 0 : i32
    return %arg0, %c0_i32 : i32, i32
  }
}

</mosaic_0001>

<llo_original>
// kernel: tpu_custom_call.1
$region0: #{tpu_custom_call.1}
  #allocation0 [shape = 'u32[]', space=smem, size = 0x4, offset = 0x4, fixed_abs, tag = 'smem constant byte address 0x4 - core index']
  #allocation1 [shape = 'u32[144,128]{1,0:T(1,128)}', space=vmem, size = 0x12000, scoped, tag = 'internal scratch']
  #allocation2 [shape = 'f32[2,4,128]{2,1,0:T(4,128)}', space=vmem, size = 0x1000, scoped, tag = 'scratch operand']
  %s0 = inlined_call_operand.hbm [shape: f32[2,4,256], index: 0, kind: input, shape index: {}]
  %s1 = inlined_call_operand.hbm [shape: f32[4,128], index: 1, kind: input, shape index: {}]
  %s2 = inlined_call_operand.vmem [shape: f32[1,128], index: 2, kind: input, shape index: {}]
  %s3 = inlined_call_operand.hbm [shape: f32[2,128], index: 3, kind: output, shape index: {}]
  %s4 = sld [smem:[#allocation0]]
  $region61: #{tpu_custom_call.1} parent=0
    _
  %s6 = ssub.s32 1, %s4
  %s7 = scalar_select 0, %s6, %s4
  $region1: #{tpu_custom_call.1} parent=0
    #allocation3 [shape = 'u8[8192]{0}', space=vmem, size = 0x2000, scoped, tag = 'input window, operand 0']
    #allocation4 [shape = 's32[2]{0}', space=sflag, size = 0x8, scoped, tag = 'scoped memory for tpu_custom_call.1']
    #allocation5 [shape = 's32[2]{0}', space=sflag, size = 0x8, scoped, tag = 'scoped memory for tpu_custom_call.1']
    #allocation6 [shape = 'u8[2048]{0}', space=vmem, size = 0x800, scoped, tag = 'input window, operand 1, single buffered']
    #allocation7 [shape = 's32[1]{0}', space=sflag, size = 0x4, scoped, tag = 'scoped memory for tpu_custom_call.1']
    #allocation8 [shape = 'u8[1024]{0}', space=vmem, size = 0x400, scoped, tag = 'output window, operand 0, single buffered']
    %8 = vsyncpa [#allocation4], 0
    %s9 = scalar_lea.sflag [#allocation4], 1
    %10 = vsyncpa %s9, 0
    %11 = vsyncpa [#allocation7], 0
    %12 = vsyncpa [#allocation5], 0
    loop: start=0, step=1, limit=4
    $region2: #{tpu_custom_call.1} parent=1 // loop_pre_header
      _
    $region3: #{tpu_custom_call.1} parent=1 // loop_header
      %s14 = sphi 0, %s18
      %p15 = scmp.ge.s32.totalorder %s14, 4
      %s21 = sphi 0, %s33
      %s22 = sphi 0, %s29
      %s23 = sphi 0, %s21
      %s24 = sphi 0, %s22
      %s25 = sphi 0, %s23
      %s26 = sphi 0, %s24
      %s38 = sphi 0, %s40
      %s41 = sphi 0, %s38
      %s42 = sphi 0, %s41
      %s58 = sphi 0, %s42
      %s62 = sphi 0, %s62
      %s64 = sphi 0, %s62
      %s65 = sphi 0, %s64
      %s79 = sphi 0, %s65
      %s83 = sphi 0, %s83
      %s85 = sphi 0, %s83
      %s86 = sphi 0, %s85
      %s100 = sphi 0, %s86
      %s106 = sphi 0, %s108
      %s109 = sphi 0, %s106
      %s110 = sphi 0, %s109
      %s126 = sphi 0, %s110
    $region4: #{tpu_custom_call.1} parent=1 // loop_header_branch
      %17 = sbr.rel (%p15) target = $region8
    $region5: #{tpu_custom_call.1} parent=1 // loop_body
      %s19 = ssub.s32 %s14, 1
      %s20 = ssub.s32 %s14, 2
      %s27 = sadd.s32 1, %s22
      %p28 = scmp.ge.s32.totalorder %s27, 2
      %s29 = scalar_select %p28, 0, %s27
      %s30 = sadd.s32 1, %s21
      %s31 = scalar_select %p28, %s30, %s21
      %p32 = scmp.ge.s32.totalorder %s31, 1
      %s33 = scalar_select %p32, 0, %s31
      %s34 = ssub.s32 %s21, %s33
      %s35 = ssub.s32 %s22, %s29
      %s36 = sor.u32 %s34, %s35
      %p37 = scmp.eq.s32.totalorder %s36, 0
      %s39 = sadd.s32 %s38, 1
      %s40 = scalar_select %p37, %s38, %s39
      %p43 = pneg %p37
      %p44 = scmp.eq.s32.totalorder %s14, 1
      %p45 = por %p43, %p44
      %p46 = scmp.ne.s32.totalorder %s38, %s41
      %p47 = scmp.eq.s32.totalorder %s14, 0
      %p48 = por %p46, %p47
      %p49 = scmp.ne.s32.totalorder %s38, %s41
      %p50 = scmp.eq.s32.totalorder %s19, 1
      %p51 = por %p49, %p50
      %p52 = scmp.ne.s32.totalorder %s41, %s42
      %p53 = scmp.eq.s32.totalorder %s19, 0
      %p54 = por %p52, %p53
      %p55 = scmp.ne.s32.totalorder %s41, %s42
      %p56 = scmp.eq.s32.totalorder %s20, 1
      %p57 = por %p55, %p56
      %p59 = scmp.ne.s32.totalorder %s42, %s58
      %p60 = scmp.eq.s32.totalorder %s20, 0
      %p61 = por %p59, %p60
      %s63 = sadd.s32 %s62, 1
      %p66 = scmp.eq.s32.totalorder %s14, 1
      %p67 = scmp.ne.s32.totalorder %s62, %s64
      %p68 = scmp.eq.s32.totalorder %s14, 0
      %p69 = por %p67, %p68
      %p70 = scmp.ne.s32.totalorder %s62, %s64
      %p71 = scmp.eq.s32.totalorder %s19, 1
      %p72 = por %p70, %p71
      %p73 = scmp.ne.s32.totalorder %s64, %s65
      %p74 = scmp.eq.s32.totalorder %s19, 0
      %p75 = por %p73, %p74
      %p76 = scmp.ne.s32.totalorder %s64, %s65
      %p77 = scmp.eq.s32.totalorder %s20, 1
      %p78 = por %p76, %p77
      %p80 = scmp.ne.s32.totalorder %s65, %s79
      %p81 = scmp.eq.s32.totalorder %s20, 0
      %p82 = por %p80, %p81
      %s84 = sadd.s32 %s83, 1
      %p87 = scmp.eq.s32.totalorder %s14, 1
      %p88 = scmp.ne.s32.totalorder %s83, %s85
      %p89 = scmp.eq.s32.totalorder %s14, 0
      %p90 = por %p88, %p89
      %p91 = scmp.ne.s32.totalorder %s83, %s85
      %p92 = scmp.eq.s32.totalorder %s19, 1
      %p93 = por %p91, %p92
      %p94 = scmp.ne.s32.totalorder %s85, %s86
      %p95 = scmp.eq.s32.totalorder %s19, 0
      %p96 = por %p94, %p95
      %p97 = scmp.ne.s32.totalorder %s85, %s86
      %p98 = scmp.eq.s32.totalorder %s20, 1
      %p99 = por %p97, %p98
      %p101 = scmp.ne.s32.totalorder %s86, %s100
      %p102 = scmp.eq.s32.totalorder %s20, 0
      %p103 = por %p101, %p102
      %s104 = ssub.s32 %s21, %s33
      %p105 = scmp.eq.s32.totalorder %s104, 0
      %s107 = sadd.s32 %s106, 1
      %s108 = scalar_select %p105, %s106, %s107
      %p111 = pneg %p105
      %p112 = scmp.eq.s32.totalorder %s14, 1
      %p113 = por %p111, %p112
      %p114 = scmp.ne.s32.totalorder %s106, %s109
      %p115 = scmp.eq.s32.totalorder %s14, 0
      %p116 = por %p114, %p115
      %p117 = scmp.ne.s32.totalorder %s106, %s109
      %p118 = scmp.eq.s32.totalorder %s19, 1
      %p119 = por %p117, %p118
      %p120 = scmp.ne.s32.totalorder %s109, %s110
      %p121 = scmp.eq.s32.totalorder %s19, 0
      %p122 = por %p120, %p121
      %p123 = scmp.ne.s32.totalorder %s109, %s110
      %p124 = scmp.eq.s32.totalorder %s20, 1
      %p125 = por %p123, %p124
      %p127 = scmp.ne.s32.totalorder %s110, %s126
      %p128 = scmp.eq.s32.totalorder %s20, 0
      %p129 = por %p127, %p128
      %p130 = scmp.le.s32.totalorder 1, %s14
      %p131 = scmp.lt.s32.totalorder %s14, 3
      %p132 = pnand %p130, %p131
      %p133 = pneg %p132
      // Predicated region
      $region9: #{tpu_custom_call.1} parent=5 // pred_check
        _
      $region10: #{tpu_custom_call.1} parent=5 // pred_check_branch
        %135 = sbr.rel (%p132) target = $region12
      $region11: #{tpu_custom_call.1} parent=5 // pred_region
        %s136 = ssub.s32 %s14, 1
        // Predicated region
        $region13: #{tpu_custom_call.1} parent=11 // pred_check
          %p137 = pneg %p75
        $region14: #{tpu_custom_call.1} parent=11 // pred_check_branch
          %139 = sbr.rel (%p137) target = $region16
        $region15: #{tpu_custom_call.1} parent=11 // pred_region
          %s141 = ssub.s32 64, 64
          %142 = vsyncadd [#allocation7], %s141
          %s144 = sshll.u32 [#allocation6], 4
          %s145 = int_to_ptr.vmem [resolvable:$true] %s144
          %147 = dma.hbm_to_vmem [thread:$0]  %s1, 64, %s145, [#allocation7]
        $region16: #{tpu_custom_call.1} parent=11 // pred_fallthru
          _
        // Predicated region
        $region17: #{tpu_custom_call.1} parent=11 // pred_check
          %p148 = pneg %p96
        $region18: #{tpu_custom_call.1} parent=11 // pred_check_branch
          %150 = sbr.rel (%p148) target = $region20
        $region19: #{tpu_custom_call.1} parent=11 // pred_region
          _
        $region20: #{tpu_custom_call.1} parent=11 // pred_fallthru
          _
      $region12: #{tpu_custom_call.1} parent=5 // pred_fallthru
        _
      %p151 = scmp.lt.s32.totalorder %s14, 2
      // Predicated region
      $region21: #{tpu_custom_call.1} parent=5 // pred_check
        %p152 = pneg %p151
      $region22: #{tpu_custom_call.1} parent=5 // pred_check_branch
        %154 = sbr.rel (%p152) target = $region24
      $region23: #{tpu_custom_call.1} parent=5 // pred_region
        // Predicated region
        $region25: #{tpu_custom_call.1} parent=23 // pred_check
          %p155 = pneg %p48
        $region26: #{tpu_custom_call.1} parent=23 // pred_check_branch
          %157 = sbr.rel (%p155) target = $region28
        $region27: #{tpu_custom_call.1} parent=23 // pred_region
          %s158 = sand.u32 %s38, 1
          %s159 = scalar_lea.sflag [#allocation4], %s158
          %s160 = sand.u32 %s38, 1
          %s161 = smul.addr %s160, 8
          %s162 = scalar_lea.vmem [#allocation3], %s161
          %s163 = smul.u32 2, %s21
          %s165 = ssub.s32 128, 128
          %166 = vsyncadd %s159, %s165
          %s167 = smul.addr %s163, 2
          %s168 = sadd.s32 %s22, %s167
          %s169 = smul.addr %s168, 64
          %s170 = scalar_lea.hbm %s0, %s169
          %s171 = sshll.u32 %s162, 4
          %s172 = int_to_ptr.vmem [resolvable:$true] %s171
          %177 = dma.hbm_to_vmem [thread:$0]  %s170, 128, %s172, %s159, 128, 64, 4
        $region28: #{tpu_custom_call.1} parent=23 // pred_fallthru
          _
      $region24: #{tpu_custom_call.1} parent=5 // pred_fallthru
        _
      %p178 = scmp.le.s32.totalorder 1, %s14
      %p179 = scmp.lt.s32.totalorder %s14, 3
      %p180 = pnand %p178, %p179
      %p181 = pneg %p180
      // Predicated region
      $region29: #{tpu_custom_call.1} parent=5 // pred_check
        _
      $region30: #{tpu_custom_call.1} parent=5 // pred_check_branch
        %183 = sbr.rel (%p180) target = $region32
      $region31: #{tpu_custom_call.1} parent=5 // pred_region
        %s184 = ssub.s32 %s14, 1
        %s185 = sand.u32 %s41, 1
        %s186 = scalar_lea.sflag [#allocation4], %s185
        %s187 = sand.u32 %s41, 1
        %s188 = smul.addr %s187, 8
        %s189 = scalar_lea.vmem [#allocation3], %s188
        // Predicated region
        $region33: #{tpu_custom_call.1} parent=31 // pred_check
          %p190 = pneg %p54
        $region34: #{tpu_custom_call.1} parent=31 // pred_check_branch
          %192 = sbr.rel (%p190) target = $region36
        $region35: #{tpu_custom_call.1} parent=31 // pred_region
          %193 = dma.done %s186, 128
        $region36: #{tpu_custom_call.1} parent=31 // pred_fallthru
          _
        // Predicated region
        $region37: #{tpu_custom_call.1} parent=31 // pred_check
          %p194 = pneg %p75
        $region38: #{tpu_custom_call.1} parent=31 // pred_check_branch
          %196 = sbr.rel (%p194) target = $region40
        $region39: #{tpu_custom_call.1} parent=31 // pred_region
          %197 = dma.done [#allocation7], 64
        $region40: #{tpu_custom_call.1} parent=31 // pred_fallthru
          _
        %s198 = sand.u32 %s41, 1
        %s199 = scalar_lea.sflag [#allocation4], %s198
        %s200 = sand.u32 %s41, 1
        %s201 = smul.addr %s200, 8
        %s202 = scalar_lea.vmem [#allocation3], %s201
        %p203 = pneg %p54
        %p204 = pneg %p51
        %p205 = pneg %p75
        %p206 = pneg %p72
        %p207 = pneg %p96
        %p208 = pneg %p93
        %p209 = pneg %p122
        %p210 = pneg %p119
        %s211 = smul.u32 2, %s23
        %p212 = scmp.eq.s32.totalorder %s24, 0
        // Predicated region
        $region41: #{tpu_custom_call.1} parent=31 // pred_check
          %p213 = pneg %p212
        $region42: #{tpu_custom_call.1} parent=31 // pred_check_branch
          %215 = sbr.rel (%p213) target = $region44
        $region43: #{tpu_custom_call.1} parent=31 // pred_region
          %216 = vst [vmem:[#allocation2] sm:$0xf] 0.0
          %217 = vst [vmem:[#allocation2 + $0x4] sm:$0xf] 0.0
        $region44: #{tpu_custom_call.1} parent=31 // pred_fallthru
          _
        %v218 = vld [vmem:[%s189] sm:$0xf]
        %v219 = vld [vmem:[%s189 + $0x4] sm:$0xf]
        %v220 = vld [vmem:[#allocation2] sm:$0xf]
        %v221 = vld [vmem:[#allocation2 + $0x4] sm:$0xf]
        %v222 = vadd.f32 %v220, %v218
        %v223 = vadd.f32 %v221, %v219
        %224 = vst [vmem:[#allocation2] sm:$0xf] %v222
        %225 = vst [vmem:[#allocation2 + $0x4] sm:$0xf] %v223
        %p226 = scmp.eq.s32.totalorder %s24, 1
        // Predicated region
        $region45: #{tpu_custom_call.1} parent=31 // pred_check
          %p227 = pneg %p226
        $region46: #{tpu_custom_call.1} parent=31 // pred_check_branch
          %229 = sbr.rel (%p227) target = $region48
        $region47: #{tpu_custom_call.1} parent=31 // pred_region
          %v230 = vld [vmem:[#allocation2] sm:$0xf]
          %v231 = vld [vmem:[#allocation2 + $0x4] sm:$0xf]
          %vm232 = vcmask 1043456
          %v233 = vsel %vm232, %v230, 0.0
          %234 = vadd.xlane.f32.xlu0 %v233
          %v235 = vpop.xlane.xlu0 %234
          %v236 = vsel %vm232, %v231, 0.0
          %237 = vadd.xlane.f32.xlu0 %v236
          %v238 = vpop.xlane.xlu0 %237
          %v239 = vld [vmem:[#allocation6] sm:$0xf]
          %v240 = vld [vmem:[%s2] sm:$0x1]
          %v242 = vlaneseq
          %v243 = vshrl.u32 %v242, 7
          %v244 = vsub.s32 0, %v243
          %v245 = vrot.slane %v240, %v244
          %v249 = vlaneseq
          %v250 = vand.u32 %v249, 127
          %v251 = vlaneseq
          %v252 = vshrl.u32 %v251, 7
          %v253 = vsub.s32 %v250, %v252
          %v254 = vrot.slane %v235, %v253
          %v255 = vlaneseq
          %v256 = vshrl.u32 %v255, 7
          %v257 = vsub.s32 %v250, %v256
          %v258 = vrot.slane %v238, %v257
          %vm259 = vcmask 1041409
          %v260 = vsel %vm259, %v258, %v254
          %vm261 = vcmask 31744
          %v262 = vsel %vm261, %v260, 0
          %v265 = vsel %vm232, %v239, 0
          %267 = vmatprep.subr.mxu0 0.0
          %268 = vmatpush1.msra.mxu0 0.0
          %269 = vmatprep.subr.mxu0 0.0
          %270 = vmatpush1.msra.mxu0 0.0
          %271 = vmatprep.subr.mxu0 0.0
          %272 = vmatpush1.msra.mxu0 0.0
          %273 = vmatprep.subr.mxu0 0.0
          %274 = vmatpush1.msra.mxu0 0.0
          %275 = vmatprep.subr.mxu0 0.0
          %276 = vmatpush1.msra.mxu0 0.0
          %277 = vmatprep.subr.mxu0 0.0
          %278 = vmatpush1.msra.mxu0 0.0
          %279 = vmatprep.subr.mxu0 0.0
          %280 = vmatpush1.msra.mxu0 0.0
          %281 = vmatprep.subr.mxu0 0.0
          %282 = vmatpush1.msra.mxu0 0.0
          %283 = vmatprep.subr.mxu0 0.0
          %284 = vmatpush1.msra.mxu0 0.0
          %285 = vmatprep.subr.mxu0 0.0
          %286 = vmatpush1.msra.mxu0 0.0
          %287 = vmatprep.subr.mxu0 0.0
          %288 = vmatpush1.msra.mxu0 0.0
          %289 = vmatprep.subr.mxu0 0.0
          %290 = vmatpush1.msra.mxu0 0.0
          %291 = vmatprep.subr.mxu0 0.0
          %292 = vmatpush1.msra.mxu0 0.0
          %293 = vmatprep.subr.mxu0 0.0
          %294 = vmatpush1.msra.mxu0 0.0
          %295 = vmatprep.subr.mxu0 0.0
          %296 = vmatpush1.msra.mxu0 0.0
          %297 = vmatprep.subr.mxu0 0.0
          %298 = vmatpush1.msra.mxu0 %v265
          %299 = vmatprep.subr.mxu0 0.0
          %300 = vmatpush2.msra.mxu0 0.0
          %301 = vmatprep.subr.mxu0 0.0
          %302 = vmatpush2.msra.mxu0 0.0
          %303 = vmatprep.subr.mxu0 0.0
          %304 = vmatpush2.msra.mxu0 0.0
          %305 = vmatprep.subr.mxu0 0.0
          %306 = vmatpush2.msra.mxu0 0.0
          %307 = vmatprep.subr.mxu0 0.0
          %308 = vmatpush2.msra.mxu0 0.0
          %309 = vmatprep.subr.mxu0 0.0
          %310 = vmatpush2.msra.mxu0 0.0
          %311 = vmatprep.subr.mxu0 0.0
          %312 = vmatpush2.msra.mxu0 0.0
          %313 = vmatprep.subr.mxu0 0.0
          %314 = vmatpush2.msra.mxu0 0.0
          %315 = vmatprep.subr.mxu0 0.0
          %316 = vmatpush2.msra.mxu0 0.0
          %317 = vmatprep.subr.mxu0 0.0
          %318 = vmatpush2.msra.mxu0 0.0
          %319 = vmatprep.subr.mxu0 0.0
          %320 = vmatpush2.msra.mxu0 0.0
          %321 = vmatprep.subr.mxu0 0.0
          %322 = vmatpush2.msra.mxu0 0.0
          %323 = vmatprep.subr.mxu0 0.0
          %324 = vmatpush2.msra.mxu0 0.0
          %325 = vmatprep.subr.mxu0 0.0
          %326 = vmatpush2.msra.mxu0 0.0
          %327 = vmatprep.subr.mxu0 0.0
          %328 = vmatpush2.msra.mxu0 0.0
          %329 = vmatprep.subr.mxu0 0.0
          %330 = vmatpush2.msra.mxu0 0.0
          %331 = vmatprep.mubr.f32.mxu0 0.0
          %332 = vmatmul.mubr.f32.gmra.mxu0 %v262
          %v333 = vpop.f32.mrf.mxu0
          %v334 = vadd.f32 %v245, %v333
          %v335 = vpop.f32.mrf.mxu0
          %336 = vdwg.mxu0
          %337 = vst [vmem:[#allocation8] sm:$0x3] %v334
        $region48: #{tpu_custom_call.1} parent=31 // pred_fallthru
          _
        // Predicated region
        $region49: #{tpu_custom_call.1} parent=31 // pred_check
          %p338 = pneg %p119
        $region50: #{tpu_custom_call.1} parent=31 // pred_check_branch
          %340 = sbr.rel (%p338) target = $region52
        $region51: #{tpu_custom_call.1} parent=31 // pred_region
          %s342 = ssub.s32 32, 32
          %343 = vsyncadd [#allocation5], %s342
          %s344 = smul.addr %s23, 32
          %s345 = scalar_lea.hbm %s3, %s344
          %s347 = sshll.u32 [#allocation8], 4
          %s348 = int_to_ptr.vmem [resolvable:$true] %s347
          %350 = dma.vmem_to_hbm [thread:$0]  %s348, 32, %s345, [#allocation5]
        $region52: #{tpu_custom_call.1} parent=31 // pred_fallthru
          _
        // Predicated region
        $region53: #{tpu_custom_call.1} parent=31 // pred_check
          %p351 = pneg %p119
        $region54: #{tpu_custom_call.1} parent=31 // pred_check_branch
          %353 = sbr.rel (%p351) target = $region56
        $region55: #{tpu_custom_call.1} parent=31 // pred_region
          %354 = dma.done [#allocation5], 32
        $region56: #{tpu_custom_call.1} parent=31 // pred_fallthru
          _
      $region32: #{tpu_custom_call.1} parent=5 // pred_fallthru
        _
      %p355 = scmp.le.s32.totalorder 2, %s14
      // Predicated region
      $region57: #{tpu_custom_call.1} parent=5 // pred_check
        %p356 = pneg %p355
      $region58: #{tpu_custom_call.1} parent=5 // pred_check_branch
        %358 = sbr.rel (%p356) target = $region60
      $region59: #{tpu_custom_call.1} parent=5 // pred_region
        %s359 = ssub.s32 %s14, 2
      $region60: #{tpu_custom_call.1} parent=5 // pred_fallthru
        _
    $region6: #{tpu_custom_call.1} parent=1 // loop_footer
      %s18 = sadd.s32 1, %s14
    $region7: #{tpu_custom_call.1} parent=1 // loop_footer_branch
      %13 = sbr.rel target = $region3
    $region8: #{tpu_custom_call.1} parent=1 // loop_exit
      _
    %360 = vsyncpa [#allocation4], 1
    %s361 = scalar_lea.sflag [#allocation4], 1
    %362 = vsyncpa %s361, 1
    %363 = vsyncpa [#allocation7], 1
    %364 = vsyncpa [#allocation5], 1
    %s365 = scalar_lea.sflag [#allocation5], 1
    %366 = vsyncpa %s365, 1

</llo_original>
